<compile_context>
chip_gen: v7x
topology: tpu7x:2x2x1
jax: 0.10.0
libtpu: 0.0.40
codegen_flags: <defaults>
</compile_context>

<pallas_src>
import functools
import math

import jax
import jax.numpy as jnp
from jax.experimental import pallas as pl
from jax.experimental.pallas import tpu as pltpu


# ----------------------------------------------------------------------------- helpers
def _round_up(x, m):
    return ((x + m - 1) // m) * m


_TRACER = getattr(getattr(jax, 'core', None), 'Tracer', ())


# ============================================================================ Pallas kernels
# ------------------------------------------------------------------ fused matmul (+bias, +SiLU)
def _mm_bias_kernel(a_ref, b_ref, bias_ref, o_ref, *, activation):
    y = jnp.dot(a_ref[...], b_ref[...], preferred_element_type=jnp.float32)
    y = y + bias_ref[...]
    if activation == 'silu':
        y = y * jax.nn.sigmoid(y)
    o_ref[...] = y.astype(o_ref.dtype)


def _mm_kernel(a_ref, b_ref, o_ref, *, activation):
    y = jnp.dot(a_ref[...], b_ref[...], preferred_element_type=jnp.float32)
    if activation == 'silu':
        y = y * jax.nn.sigmoid(y)
    o_ref[...] = y.astype(o_ref.dtype)


def pallas_matmul(a, b, bias=None, activation=None, out_dtype=jnp.bfloat16):
    """a: (M, K), b: (K, N) -> (M, N) bf16.  bf16 MXU operands, f32 accumulation,
    bias add + optional SiLU fused in the epilogue.  B is a full (Kp, Np) block with a
    constant index map -> DMA'd once and resident in VMEM (this net's GEMMs are skinny)."""
    M, K = a.shape
    K2, N = b.shape
    assert K == K2
    a = a.astype(jnp.bfloat16)
    b = b.astype(jnp.bfloat16)

    Kp = _round_up(K, 128)
    Np = _round_up(N, 128)
    Mp = _round_up(M, 8)

    # cap the A tile (~2 MiB bf16) and the f32 epilogue tile (~4 MiB) so everything
    # (A tile + resident B + out tile, double-buffered) stays well inside scoped VMEM.
    a_rows = max(8, ((2 << 20) // (Kp * 2)) // 8 * 8)
    o_rows = max(8, ((4 << 20) // (Np * 4)) // 8 * 8)
    cap = max(8, min(2048, a_rows, o_rows))
    if Mp <= cap:
        tm = Mp
    else:
        tm = cap
        Mp = _round_up(Mp, tm)

    a_p = jnp.pad(a, ((0, Mp - M), (0, Kp - K))) if (Mp > M or Kp > K) else a
    b_p = jnp.pad(b, ((0, Kp - K), (0, Np - N))) if (Kp > K or Np > N) else b

    in_specs = [pl.BlockSpec((tm, Kp), lambda i: (i, 0)),
                pl.BlockSpec((Kp, Np), lambda i: (0, 0))]
    args = [a_p, b_p]
    if bias is not None:
        bias_p = jnp.pad(bias.astype(jnp.float32).reshape(1, N), ((0, 0), (0, Np - N)))
        in_specs.append(pl.BlockSpec((1, Np), lambda i: (0, 0)))
        args.append(bias_p)
        kern = functools.partial(_mm_bias_kernel, activation=activation)
    else:
        kern = functools.partial(_mm_kernel, activation=activation)

    out = pl.pallas_call(
        kern,
        out_shape=jax.ShapeDtypeStruct((Mp, Np), out_dtype),
        grid=(Mp // tm,),
        in_specs=in_specs,
        out_specs=pl.BlockSpec((tm, Np), lambda i: (i, 0)),
        compiler_params=pltpu.CompilerParams(dimension_semantics=("parallel",)),
    )(*args)
    return out[:M, :N]


# ------------------------------------------------------------------ attention (lane-dense fused-QKV input)
def _attn_kernel(qkv_ref, b_ref, o_ref, *, heads, dim_head, scale):
    qkv = qkv_ref[0]                                  # (N, 3*inner) bf16, resident in VMEM
    inner = heads * dim_head
    outs = []
    for h in range(heads):                            # unrolled; heads is small
        q = qkv[:, h * dim_head:(h + 1) * dim_head]
        k = qkv[:, inner + h * dim_head: inner + (h + 1) * dim_head]
        v = qkv[:, 2 * inner + h * dim_head: 2 * inner + (h + 1) * dim_head]
        s = jnp.einsum('qd,kd->qk', q, k, preferred_element_type=jnp.float32)
        s = s * scale + b_ref[h].astype(jnp.float32)
        s = s - jnp.max(s, axis=-1, keepdims=True)
        e = jnp.exp(s)
        p = (e * pl.reciprocal(jnp.sum(e, axis=-1, keepdims=True), approx=True)
             ).astype(jnp.bfloat16)
        outs.append(jnp.dot(p, v, preferred_element_type=jnp.float32))
    o_ref[0] = jnp.concatenate(outs, axis=-1).astype(o_ref.dtype)


def pallas_attention(qkv, bias, heads, dim_head, scale):
    """qkv: (Bn, N, 3*heads*dim_head) bf16; bias: (heads, N, N) bf16 (shared over Bn).
    -> (Bn, N, heads*dim_head) bf16."""
    # TODO(synk): flash-style (q-block, kv-loop) tiling so the (N, N) logits never fully
    #             materialize for large N on v7x's 64 MiB VMEM.
    Bn, N, three_inner = qkv.shape
    inner = heads * dim_head
    assert three_inner == 3 * inner
    return pl.pallas_call(
        functools.partial(_attn_kernel, heads=heads, dim_head=dim_head, scale=scale),
        out_shape=jax.ShapeDtypeStruct((Bn, N, inner), jnp.bfloat16),
        grid=(Bn,),
        in_specs=[pl.BlockSpec((1, N, three_inner), lambda b: (b, 0, 0)),
                  pl.BlockSpec((heads, N, N), lambda b: (0, 0, 0))],
        out_specs=pl.BlockSpec((1, N, inner), lambda b: (b, 0, 0)),
        compiler_params=pltpu.CompilerParams(dimension_semantics=("parallel",)),
    )(qkv, bias)


# ------------------------------------------------------------------ GroupNorm + FiLM + SiLU (S-tiled, two kernels)
def _gn_stats_kernel(x_ref, s1_ref, s2_ref):
    @pl.when(pl.program_id(1) == 0)
    def _():
        s1_ref[...] = jnp.zeros_like(s1_ref)
        s2_ref[...] = jnp.zeros_like(s2_ref)
    x = x_ref[0].astype(jnp.float32)                  # (tS, C)
    s1_ref[...] += jnp.sum(x, axis=0, keepdims=True)
    s2_ref[...] += jnp.sum(x * x, axis=0, keepdims=True)


def _gn_apply_kernel(x_ref, sc_ref, sh_ref, o_ref):
    x = x_ref[0].astype(jnp.float32)                  # (tS, C)
    y = x * sc_ref[...] + sh_ref[...]                 # folded GN-affine + FiLM
    o_ref[0] = (y * jax.nn.sigmoid(y)).astype(o_ref.dtype)   # SiLU


def groupnorm_film_silu(x, gamma, beta, scale_shift, groups=8):
    """x: (B, T, H, W, C) bf16. GroupNorm (affine) -> optional (scale+1)*x+shift -> SiLU."""
    B, T, H, W, C = x.shape
    G = groups
    Cg = C // G
    S = T * H * W
    xr = x.astype(jnp.bfloat16).reshape(B, S, C)

    # tile the S axis so this scales beyond VMEM (stats accumulate over an 'arbitrary' axis)
    if S <= 2048:
        tS = _round_up(S, 8)
    else:
        tS = 1024
    Sp = _round_up(S, tS)
    if Sp > S:
        xr = jnp.pad(xr, ((0, 0), (0, Sp - S), (0, 0)))    # zero rows don't perturb the sums
    nS = Sp // tS

    s1, s2 = pl.pallas_call(
        _gn_stats_kernel,
        out_shape=(jax.ShapeDtypeStruct((B, C), jnp.float32),
                   jax.ShapeDtypeStruct((B, C), jnp.float32)),
        grid=(B, nS),
        in_specs=[pl.BlockSpec((1, tS, C), lambda b, s: (b, s, 0))],
        out_specs=(pl.BlockSpec((1, C), lambda b, s: (b, 0)),
                   pl.BlockSpec((1, C), lambda b, s: (b, 0))),
        compiler_params=pltpu.CompilerParams(
            dimension_semantics=("parallel", "arbitrary")),
    )(xr)

    # group aggregation + folded affine/FiLM -> tiny per-(b, c) scale / shift (plain XLA)
    # TODO(synk): one-pass E[x^2]-mean^2 variance (clamped) can lose precision for large-mean
    #             activations vs. PyTorch's two-pass variance.
    n = float(S * Cg)
    mean_g = s1.reshape(B, G, Cg).sum(-1) / n                       # (B, G)
    var_g = jnp.maximum(s2.reshape(B, G, Cg).sum(-1) / n - mean_g * mean_g, 0.0)
    rstd_g = jax.lax.rsqrt(var_g + 1e-5)
    mean_c = jnp.repeat(mean_g, Cg, axis=-1)                        # (B, C)
    rstd_c = jnp.repeat(rstd_g, Cg, axis=-1)

    if scale_shift is None:
        A = jnp.broadcast_to(gamma[None, :], (B, C)).astype(jnp.float32)
        Bv = jnp.broadcast_to(beta[None, :], (B, C)).astype(jnp.float32)
    else:
        fscale, fshift = scale_shift                                # each (B, C)
        fscale = fscale.astype(jnp.float32)
        fshift = fshift.astype(jnp.float32)
        A = gamma[None, :] * (fscale + 1.0)
        Bv = beta[None, :] * (fscale + 1.0) + fshift
    sc = rstd_c * A
    sh = Bv - mean_c * rstd_c * A

    out = pl.pallas_call(
        _gn_apply_kernel,
        out_shape=jax.ShapeDtypeStruct((B, Sp, C), jnp.bfloat16),
        grid=(B, nS),
        in_specs=[pl.BlockSpec((1, tS, C), lambda b, s: (b, s, 0)),
                  pl.BlockSpec((1, C), lambda b, s: (b, 0)),
                  pl.BlockSpec((1, C), lambda b, s: (b, 0))],
        out_specs=pl.BlockSpec((1, tS, C), lambda b, s: (b, s, 0)),
        compiler_params=pltpu.CompilerParams(
            dimension_semantics=("parallel", "parallel")),
    )(xr, sc, sh)
    return out[:, :S].reshape(B, T, H, W, C)


# ------------------------------------------------------------------ LayerNorm over last dim (gamma only)
def _ln_kernel(x_ref, g_ref, o_ref, *, eps):
    x = x_ref[...].astype(jnp.float32)
    mean = jnp.mean(x, axis=-1, keepdims=True)
    xc = x - mean
    var = jnp.mean(xc * xc, axis=-1, keepdims=True)
    o_ref[...] = (xc * jax.lax.rsqrt(var + eps) * g_ref[...]).astype(o_ref.dtype)


def pallas_layernorm(x, gamma, eps=1e-5):
    """x: (M, C) bf16, gamma: (C,). LayerNorm over last dim, gamma only (no beta). bf16 out."""
    M, C = x.shape
    x = x.astype(jnp.bfloat16)
    Mp = _round_up(M, 8)
    if Mp <= 512:
        tm = Mp
    else:
        tm = 512
        Mp = _round_up(Mp, 512)
    xp = jnp.pad(x, ((0, Mp - M), (0, 0))) if Mp > M else x
    g = gamma.reshape(1, C).astype(jnp.float32)
    out = pl.pallas_call(
        functools.partial(_ln_kernel, eps=eps),
        out_shape=jax.ShapeDtypeStruct((Mp, C), jnp.bfloat16),
        grid=(Mp // tm,),
        in_specs=[pl.BlockSpec((tm, C), lambda i: (i, 0)),
                  pl.BlockSpec((1, C), lambda i: (0, 0))],
        out_specs=pl.BlockSpec((tm, C), lambda i: (i, 0)),
        compiler_params=pltpu.CompilerParams(dimension_semantics=("parallel",)),
    )(xp, g)
    return out[:M]


# ============================================================================ conv / linear glue (bf16 im2col -> fused Pallas matmul)
def conv2d_same(x, w, b=None):
    """x: (N, H, W, Cin) bf16; w: (Cout, Cin, k, k) (PyTorch layout); stride 1, pad k//2."""
    N, H, W, Cin = x.shape
    Cout, _, k, _ = w.shape
    x = x.astype(jnp.bfloat16)
    if k >= 5:
        # TODO(synk): replace with an in-kernel halo-DMA gather; XLA conv avoids the k*k
        #             im2col HBM blowup on the 7x7 stem.
        y = jax.lax.conv_general_dilated(
            x, w.transpose(2, 3, 1, 0).astype(jnp.bfloat16),
            window_strides=(1, 1), padding='SAME',
            dimension_numbers=('NHWC', 'HWIO', 'NHWC'),
            preferred_element_type=jnp.float32)
        if b is not None:
            y = y + b.astype(jnp.float32)
        return y.astype(jnp.bfloat16)
    if k == 1:
        cols = x.reshape(N * H * W, Cin)
        wmat = w.reshape(Cout, Cin).T
    else:
        # TODO(synk): the bf16 im2col below is still materialized by XLA in HBM; an in-kernel
        #             halo DMA gather would remove that traffic.
        p_ = k // 2
        xp = jnp.pad(x, ((0, 0), (p_, p_), (p_, p_), (0, 0)))
        cols = jnp.concatenate(
            [xp[:, dy:dy + H, dx:dx + W, :] for dy in range(k) for dx in range(k)],
            axis=-1).reshape(N * H * W, k * k * Cin)
        wmat = w.transpose(2, 3, 1, 0).reshape(k * k * Cin, Cout)   # rows ordered (ky, kx, cin)
    y = pallas_matmul(cols, wmat, b)
    return y.reshape(N, H, W, Cout)


def conv1d_same(x, w, b=None):
    """x: (N, T, Cin) bf16; w: (Cout, Cin, k); stride 1, pad k//2."""
    N, T, Cin = x.shape
    Cout, _, k = w.shape
    x = x.astype(jnp.bfloat16)
    p_ = k // 2
    xp = jnp.pad(x, ((0, 0), (p_, p_), (0, 0)))
    cols = jnp.concatenate([xp[:, dt:dt + T, :] for dt in range(k)], axis=-1)
    cols = cols.reshape(N * T, k * Cin)
    wmat = w.transpose(2, 1, 0).reshape(k * Cin, Cout)
    y = pallas_matmul(cols, wmat, b)
    return y.reshape(N, T, Cout)


# ============================================================================ module forward functions (channels-last, bf16)
def pseudo_conv3d(p, x, enable_time):
    """PseudoConv3d: spatial conv2d per frame, optional temporal conv1d per pixel.
    x: (B, T, H, W, C) bf16."""
    B, T, H, W, C = x.shape
    xi = x.reshape(B * T, H, W, C)
    xi = conv2d_same(xi, p['sw'], p.get('sb'))
    Cout = p['sw'].shape[0]
    x = xi.reshape(B, T, H, W, Cout)
    if (not enable_time) or ('tw' not in p):
        return x
    xt = x.transpose(0, 2, 3, 1, 4).reshape(B * H * W, T, Cout)
    xt = conv1d_same(xt, p['tw'], p['tb'])
    return xt.reshape(B, H, W, T, Cout).transpose(0, 3, 1, 2, 4)


def block_fwd(p, x, scale_shift, enable_time):
    x = pseudo_conv3d(p['proj'], x, enable_time)
    return groupnorm_film_silu(x, p['gn_g'], p['gn_b'], scale_shift, groups=8)


def resnet_block(p, x, t_emb, enable_time):
    scale_shift = None
    if ('mlp_w' in p) and (t_emb is not None):
        h = pallas_matmul(jax.nn.silu(t_emb), p['mlp_w'].T, p['mlp_b'])
        scale, shift = jnp.split(h, 2, axis=-1)
        scale_shift = (scale, shift)
    h = block_fwd(p['block1'], x, scale_shift, enable_time)
    h = block_fwd(p['block2'], h, None, enable_time)
    res = pseudo_conv3d(p['res'], x, enable_time) if 'res' in p else x
    return h + res


def cont_pos_bias(p, dims):
    # tiny, data-independent MLP -> plain XLA (avoids 64x MXU-column waste on the 2-wide
    # first layer); cached per (layer, dims) and stored bf16 below.
    grids = jnp.meshgrid(*[jnp.arange(d) for d in dims], indexing='ij')
    grid = jnp.stack(grids, axis=-1).reshape(-1, len(dims)).astype(jnp.float32)
    rel = grid[:, None, :] - grid[None, :, :]
    rel = jnp.sign(rel) * jnp.log(jnp.abs(rel) + 1.0)
    n = rel.shape[0]
    h = rel.reshape(n * n, len(dims))
    h = jax.nn.silu(h @ p['w0'].T + p['b0'])
    h = jax.nn.silu(h @ p['w1'].T + p['b1'])
    h = h @ p['w2'].T + p['b2']
    return h.reshape(n, n, -1).transpose(2, 0, 1).astype(jnp.bfloat16)   # (heads, n, n)


def cont_pos_bias_cached(p, dims):
    cache = p.setdefault('_cache', {})
    if dims in cache:
        return cache[dims]
    bias = cont_pos_bias(p, dims)
    if not (isinstance(_TRACER, type) and isinstance(bias, _TRACER)):   # don't cache tracers
        cache[dims] = bias
    return bias


def attention(p, x, rel_pos_bias, heads, dim_head):
    """x: (Bn, N, C) bf16; rel_pos_bias: (heads, N, N) bf16."""
    Bn, N, C = x.shape
    inner = heads * dim_head
    xf = pallas_layernorm(x.reshape(Bn * N, C), p['norm_g'])
    # fused QKV projection: one resident-B matmul, xf read once
    wqkv = jnp.concatenate([p['wq'], p['wk'], p['wv']], axis=0)          # (3*inner, C)
    qkv = pallas_matmul(xf, wqkv.T).reshape(Bn, N, 3 * inner)
    o = pallas_attention(qkv, rel_pos_bias, heads, dim_head, scale=dim_head ** -0.5)
    out = pallas_matmul(o.reshape(Bn * N, inner), p['wo'].T)
    return out.reshape(Bn, N, C)


def feed_forward(p, x, enable_time):
    """GEGLU FF with token-shift and ChanLayerNorm (channels-last)."""
    B, T, H, W, C = x.shape
    inner = p['w_out'].shape[1]
    rows = x.reshape(-1, C)
    h = pallas_matmul(rows, p['w_in'].T)                                 # (rows, 2*inner)
    a, gate = h[:, :inner], h[:, inner:]
    h = (a.astype(jnp.float32) *
         jax.nn.gelu(gate.astype(jnp.float32), approximate=False)).astype(jnp.bfloat16)
    h = h.reshape(B, T, H, W, inner)
    if enable_time:                                   # shift half the channels by one frame
        # TODO(synk): fold the token-shift into a BlockSpec index_map instead of an HBM pad/concat.
        c1 = (inner + 1) // 2
        ha, hb = h[..., :c1], h[..., c1:]
        hb = jnp.pad(hb, ((0, 0), (1, 0), (0, 0), (0, 0), (0, 0)))[:, :-1]
        h = jnp.concatenate([ha, hb], axis=-1)
    h2 = pallas_layernorm(h.reshape(-1, inner), p['cln_g'])              # ChanLayerNorm == lane LN
    out = pallas_matmul(h2, p['w_out'].T)
    return out.reshape(B, T, H, W, C)


def spatio_temporal_attention(p, x, enable_time):
    B, T, H, W, C = x.shape
    heads, dim_head = p['heads'], p['dim_head']
    # spatial attention: (b t) (h w) c
    xs = x.reshape(B * T, H * W, C)
    bias_s = cont_pos_bias_cached(p['spb'], (H, W))
    xs = attention(p['sattn'], xs, bias_s, heads, dim_head) + xs
    x = xs.reshape(B, T, H, W, C)
    if enable_time:
        # temporal attention: (b h w) t c
        xt = x.transpose(0, 2, 3, 1, 4).reshape(B * H * W, T, C)
        bias_t = cont_pos_bias_cached(p['tpb'], (T,))
        xt = attention(p['tattn'], xt, bias_t, heads, dim_head) + xt
        x = xt.reshape(B, H, W, T, C).transpose(0, 3, 1, 2, 4)
    if 'ff' in p:
        x = feed_forward(p['ff'], x, enable_time) + x
    return x


def downsample(p, x, enable_time):
    # TODO(synk): fold the pixel-unshuffle 6-D transpose into the matmul BlockSpec index_map.
    B, T, H, W, C = x.shape
    xr = x.reshape(B * T, H // 2, 2, W // 2, 2, C).transpose(0, 1, 3, 5, 2, 4)
    xr = xr.reshape(B * T * (H // 2) * (W // 2), C * 4)
    C2 = p['space_w'].shape[0]
    xr = pallas_matmul(xr, p['space_w'].reshape(C2, -1).T)
    x = xr.reshape(B, T, H // 2, W // 2, C2)
    if ('time_w' in p) and enable_time:
        B_, T_, H_, W_, C_ = x.shape
        xt = x.reshape(B_, T_ // 2, 2, H_, W_, C_).transpose(0, 1, 3, 4, 5, 2)
        xt = xt.reshape(B_ * (T_ // 2) * H_ * W_, C_ * 2)
        xt = pallas_matmul(xt, p['time_w'].T)
        x = xt.reshape(B_, T_ // 2, H_, W_, p['time_w'].shape[0])
    return x


def upsample(p, x, enable_time):
    # TODO(synk): fold the pixel-shuffle 6-D transpose into the matmul BlockSpec index_map.
    B, T, H, W, C = x.shape
    rows = x.reshape(B * T * H * W, C)
    y = pallas_matmul(rows, p['space_w'].reshape(p['space_w'].shape[0], -1).T, p['space_b'])
    y = y.reshape(B * T, H, W, C, 2, 2).transpose(0, 1, 4, 2, 5, 3)
    x = y.reshape(B, T, H * 2, W * 2, C)
    if ('time_w' in p) and enable_time:
        B_, T_, H_, W_, C_ = x.shape
        rows = x.reshape(-1, C_)
        y = pallas_matmul(rows, p['time_w'].T, p['time_b'])              # (rows, 2C)
        y = y.reshape(B_, T_, H_, W_, C_, 2).transpose(0, 1, 5, 2, 3, 4)
        x = y.reshape(B_, T_ * 2, H_, W_, C_)
    return x


def sinusoidal_pos_emb(t, dim):
    half = dim // 2
    emb = jnp.exp(jnp.arange(half, dtype=jnp.float32) * -(math.log(10000.0) / (half - 1)))
    emb = t.reshape(-1)[:, None].astype(jnp.float32) * emb[None, :]
    return jnp.concatenate([jnp.sin(emb), jnp.cos(emb)], axis=-1)


# ============================================================================ parameter init
class ParamGen:
    def __init__(self, seed=0):
        self.key = jax.random.PRNGKey(seed)

    def next(self, shape, scale=0.05):
        self.key, sub = jax.random.split(self.key)
        return jax.random.normal(sub, shape, jnp.float32) * scale


def dirac_conv1d(dim, k):
    w = jnp.zeros((dim, dim, k), jnp.float32)
    return w.at[jnp.arange(dim), jnp.arange(dim), k // 2].set(1.0)


def init_pseudo_conv3d(pg, din, dout, k, tk):
    p = {'sw': pg.next((dout, din, k, k)), 'sb': pg.next((dout,))}
    if k > 1:
        p['tw'] = dirac_conv1d(dout, tk)           # identity init (matches reference dirac init)
        p['tb'] = jnp.zeros((dout,), jnp.float32)
    return p


def init_block(pg, din, dout):
    return {'proj': init_pseudo_conv3d(pg, din, dout, 3, 3),
            'gn_g': jnp.ones((dout,), jnp.float32),
            'gn_b': jnp.zeros((dout,), jnp.float32)}


def init_resnet(pg, din, dout, tcond_dim=None):
    p = {'block1': init_block(pg, din, dout), 'block2': init_block(pg, dout, dout)}
    if tcond_dim is not None:
        p['mlp_w'] = pg.next((dout * 2, tcond_dim))
        p['mlp_b'] = jnp.zeros((dout * 2,), jnp.float32)
    if din != dout:
        p['res'] = {'sw': pg.next((dout, din, 1, 1)), 'sb': pg.next((dout,))}
    return p


def init_attention(pg, dim, heads, dim_head):
    inner = heads * dim_head
    return {'norm_g': jnp.ones((dim,), jnp.float32),
            'wq': pg.next((inner, dim)), 'wk': pg.next((inner, dim)),
            'wv': pg.next((inner, dim)), 'wo': pg.next((dim, inner))}


def init_cpb(pg, dim, heads, num_dims):
    return {'w0': pg.next((dim, num_dims)), 'b0': jnp.zeros((dim,), jnp.float32),
            'w1': pg.next((dim, dim)), 'b1': jnp.zeros((dim,), jnp.float32),
            'w2': pg.next((heads, dim)), 'b2': jnp.zeros((heads,), jnp.float32)}


def init_st_attn(pg, dim, heads, dim_head, add_ff=True):
    p = {'sattn': init_attention(pg, dim, heads, dim_head),
         'spb': init_cpb(pg, dim // 2, heads, 2),
         'tattn': init_attention(pg, dim, heads, dim_head),
         'tpb': init_cpb(pg, dim // 2, heads, 1),
         'heads': heads, 'dim_head': dim_head}
    if add_ff:
        inner = int(dim * 4 * 2 / 3)
        p['ff'] = {'w_in': pg.next((inner * 2, dim)),
                   'cln_g': jnp.ones((inner,), jnp.float32),
                   'w_out': pg.next((dim, inner))}
    return p


def init_down(pg, dim, compress_time):
    p = {'space_w': pg.next((dim, dim * 4, 1, 1))}
    if compress_time:
        p['time_w'] = pg.next((dim, dim * 2))
    return p


def init_up(pg, dim, compress_time):
    p = {'space_w': pg.next((dim * 4, dim, 1, 1)), 'space_b': pg.next((dim * 4,))}
    if compress_time:
        p['time_w'] = pg.next((dim * 2, dim))
        p['time_b'] = pg.next((dim * 2,))
    return p


def init_space_time_unet(pg, cfg):
    dim = cfg['dim']
    channels = cfg['channels']
    in_channels = channels * 2          # cond_type == 'cat'
    dims = [dim] + [m * dim for m in cfg['dim_mult']]
    tcond = dim * 4                     # condition_on_timestep=True
    P = {'dim': dim,
         'ts_w': pg.next((tcond, dim)), 'ts_b': jnp.zeros((tcond,), jnp.float32),
         'conv_in': init_pseudo_conv3d(pg, in_channels, dim, 7, 3),
         'conv_out': init_pseudo_conv3d(pg, dim, channels, 3, 3)}
    mid = dims[-1]
    P['mid1'] = init_resnet(pg, mid, mid, tcond)
    # mid attn uses SpatioTemporalAttention defaults (heads=8, dim_head=64), matching the
    # reference which does not pass attn_kwargs for mid_attn.
    P['mid_attn'] = init_st_attn(pg, mid, 8, 64, cfg['attention_add_ff'])
    P['mid2'] = init_resnet(pg, mid, mid, tcond)
    downs, ups = [], []
    for i, (sa, comp, depth) in enumerate(
            zip(cfg['self_attns'], cfg['temporal_compression'], cfg['resnet_block_depths'])):
        din, dout = dims[i], dims[i + 1]
        downs.append({
            'init': init_resnet(pg, din, dout, tcond),
            'blocks': [init_resnet(pg, dout, dout) for _ in range(depth)],
            'attn': init_st_attn(pg, dout, cfg['attn_heads'], cfg['attn_dim_head'],
                                 cfg['attention_add_ff']) if sa else None,
            'down': init_down(pg, dout, comp)})
        ups.append({
            'init': init_resnet(pg, dout * 2, din, tcond),
            'blocks': [init_resnet(pg, din + (dout if j == 0 else 0), din)
                       for j in range(depth)],
            'attn': init_st_attn(pg, din, cfg['attn_heads'], cfg['attn_dim_head'],
                                 cfg['attention_add_ff']) if sa else None,
            'up': init_up(pg, dout, comp)})
    P['downs'] = downs
    P['ups'] = ups
    return P


# ============================================================================ SpaceTimeUnet forward
def space_time_unet_forward(params, x, time, cond, enable_time=True):
    """x: (B, C, T, H, W); time: (B,); cond: (B, C, H, W).  cond_type='cat', null_cond_prob=0."""
    B, C, T, H, W = x.shape
    # TODO(synk): random null-cond dropout (prob_mask_like) not implemented; null_cond_prob fixed to 0.
    x = x.transpose(0, 2, 3, 4, 1)                                      # channels-last (B,T,H,W,C)
    cond_rep = jnp.broadcast_to(cond.transpose(0, 2, 3, 1)[:, None],
                                (B, T, H, W, cond.shape[1]))
    x = jnp.concatenate([x, cond_rep], axis=-1).astype(jnp.bfloat16)

    # timestep conditioning: SinusoidalPosEmb -> Linear -> SiLU (fused into the matmul epilogue)
    t_emb = sinusoidal_pos_emb(time, params['dim'])
    t = pallas_matmul(t_emb, params['ts_w'].T, params['ts_b'], activation='silu')

    x = pseudo_conv3d(params['conv_in'], x, enable_time)

    hiddens = []
    for layer in params['downs']:
        x = resnet_block(layer['init'], x, t, enable_time)
        hiddens.append(x)
        for bp in layer['blocks']:
            x = resnet_block(bp, x, None, enable_time)
        if layer['attn'] is not None:
            x = spatio_temporal_attention(layer['attn'], x, enable_time)
        hiddens.append(x)
        x = downsample(layer['down'], x, enable_time)

    x = resnet_block(params['mid1'], x, t, enable_time)
    x = spatio_temporal_attention(params['mid_attn'], x, enable_time)
    x = resnet_block(params['mid2'], x, t, enable_time)

    skip_scale = 2 ** -0.5
    for layer in reversed(params['ups']):
        x = upsample(layer['up'], x, enable_time)
        x = jnp.concatenate([x, hiddens.pop() * skip_scale], axis=-1)
        x = resnet_block(layer['init'], x, t, enable_time)
        x = jnp.concatenate([x, hiddens.pop() * skip_scale], axis=-1)
        for bp in layer['blocks']:
            x = resnet_block(bp, x, None, enable_time)
        if layer['attn'] is not None:
            x = spatio_temporal_attention(layer['attn'], x, enable_time)

    x = pseudo_conv3d(params['conv_out'], x, enable_time)
    return x.transpose(0, 4, 1, 2, 3).astype(jnp.float32)               # back to (B, C, T, H, W)


# ============================================================================ main
if __name__ == "__main__":
    cfg = dict(dim=16, channels=3,
               dim_mult=(1, 2), self_attns=(False, True),
               temporal_compression=(False, True), resnet_block_depths=(1, 1),
               attn_dim_head=8, attn_heads=4, attention_add_ff=True)

    pg = ParamGen(seed=0)
    params = init_space_time_unet(pg, cfg)

    key = jax.random.PRNGKey(0)
    kx, kc = jax.random.split(key)
    B, C, T, H, W = 2, 3, 4, 8, 8          # H,W divisible by 2^num_layers=4; T divisible by frame_multiple=2
    x = jax.random.normal(kx, (B, C, T, H, W), jnp.float32)
    cond = jax.random.normal(kc, (B, C, H, W), jnp.float32)
    time = jnp.array([3.0, 7.0], jnp.float32)

    out = space_time_unet_forward(params, x, time, cond, enable_time=True)
    out = jax.block_until_ready(out)

    assert out.shape == (B, C, T, H, W), out.shape
    assert bool(jnp.all(jnp.isfinite(out)))
    print("KERNEL_OK")
</pallas_src>

<mosaic_0001>
module attributes {stable_mosaic.version = 11 : i64} {
  func.func @_mm_bias_kernel(%arg0: i32, %arg1: memref<8x128xbf16, #tpu.memory_space<vmem>>, %arg2: memref<128x128xbf16, #tpu.memory_space<vmem>>, %arg3: memref<1x128xf32, #tpu.memory_space<vmem>>, %arg4: memref<8x128xbf16, #tpu.memory_space<vmem>>) attributes {dimension_semantics = [#tpu.dimension_semantics<parallel>], iteration_bounds = array<i64: 1>, scalar_prefetch = 0 : i64, scratch_operands = 0 : i64, tpu.core_type = #tpu.core_type<tc>, window_params = [{transform_indices = @transform_0, window_bounds = array<i64: 8, 128>}, {pipeline_mode = #tpu.pipeline_mode<synchronous>, transform_indices = @transform_1, window_bounds = array<i64: 128, 128>}, {pipeline_mode = #tpu.pipeline_mode<synchronous>, transform_indices = @transform_2, window_bounds = array<i64: 1, 128>}, {transform_indices = @transform_3, window_bounds = array<i64: 8, 128>}]} {
    %c0 = arith.constant 0 : index
    %c0_0 = arith.constant 0 : index
    %0 = vector.load %arg1[%c0, %c0_0] : memref<8x128xbf16, #tpu.memory_space<vmem>>, vector<8x128xbf16>
    %c0_1 = arith.constant 0 : index
    %c0_2 = arith.constant 0 : index
    %1 = vector.load %arg2[%c0_1, %c0_2] : memref<128x128xbf16, #tpu.memory_space<vmem>>, vector<128x128xbf16>
    %cst = arith.constant dense<0.000000e+00> : vector<8x128xf32>
    %2 = tpu.matmul %0, %1, %cst {dimension_numbers = #tpu.dot_dimension_numbers<[1], [0], [0], [1], [0, 0, 1, 1], [], []>} : vector<8x128xbf16>, vector<128x128xbf16>, vector<8x128xf32> -> vector<8x128xf32>
    %c0_3 = arith.constant 0 : index
    %c0_4 = arith.constant 0 : index
    %3 = vector.load %arg3[%c0_3, %c0_4] : memref<1x128xf32, #tpu.memory_space<vmem>>, vector<1x128xf32>
    %4 = vector.broadcast %3 : vector<1x128xf32> to vector<8x128xf32>
    %5 = arith.addf %2, %4 : vector<8x128xf32>
    %6 = arith.negf %5 : vector<8x128xf32>
    %7 = math.exp %6 : vector<8x128xf32>
    %cst_5 = arith.constant 1.000000e+00 : f32
    %8 = vector.broadcast %cst_5 : f32 to vector<8x128xf32>
    %9 = arith.addf %8, %7 : vector<8x128xf32>
    %10 = arith.divf %8, %9 : vector<8x128xf32>
    %11 = arith.mulf %5, %10 : vector<8x128xf32>
    %12 = arith.truncf %11 : vector<8x128xf32> to vector<8x128xbf16>
    %c0_6 = arith.constant 0 : index
    %c0_7 = arith.constant 0 : index
    %13 = vector.load %arg4[%c0_6, %c0_7] : memref<8x128xbf16, #tpu.memory_space<vmem>>, vector<8x128xbf16>
    tpu.vector_store %arg4[%c0_6, %c0_7], %12 {strides = array<i32>} : memref<8x128xbf16, #tpu.memory_space<vmem>>, vector<8x128xbf16>,
    return
  }
  func.func @transform_0(%arg0: i32) -> (i32, i32) {
    %c0_i32 = arith.constant 0 : i32
    %c0_i32_0 = arith.constant 0 : i32
    return %arg0, %c0_i32 : i32, i32
  }
  func.func @transform_1(%arg0: i32) -> (i32, i32) {
    %c0_i32 = arith.constant 0 : i32
    %c0_i32_0 = arith.constant 0 : i32
    %c0_i32_1 = arith.constant 0 : i32
    return %c0_i32, %c0_i32_0 : i32, i32
  }
  func.func @transform_2(%arg0: i32) -> (i32, i32) {
    %c0_i32 = arith.constant 0 : i32
    %c0_i32_0 = arith.constant 0 : i32
    %c0_i32_1 = arith.constant 0 : i32
    return %c0_i32, %c0_i32_0 : i32, i32
  }
  func.func @transform_3(%arg0: i32) -> (i32, i32) {
    %c0_i32 = arith.constant 0 : i32
    %c0_i32_0 = arith.constant 0 : i32
    return %arg0, %c0_i32 : i32, i32
  }
}

</mosaic_0001>

<llo_original>
// kernel: tpu_custom_call.1
$region0: #{tpu_custom_call.1}
  #allocation0 [shape = 'u32[]', space=smem, size = 0x4, offset = 0x4, fixed_abs, tag = 'smem constant byte address 0x4 - core index']
  #allocation1 [shape = 'u32[144,128]{1,0:T(1,128)}', space=vmem, size = 0x12000, scoped, tag = 'internal scratch']
  %s0 = inlined_call_operand.hbm [shape: bf16[8,128], index: 0, kind: input, shape index: {}]
  %s1 = inlined_call_operand.hbm [shape: bf16[128,128], index: 1, kind: input, shape index: {}]
  %s2 = inlined_call_operand.vmem [shape: f32[1,128], index: 2, kind: input, shape index: {}]
  %s3 = inlined_call_operand.hbm [shape: bf16[8,128], index: 3, kind: output, shape index: {}]
  %s4 = sld [smem:[#allocation0]]
  $region30: #{tpu_custom_call.1} parent=0
    _
  %s6 = ssub.s32 1, %s4
  %s7 = scalar_select 0, %s6, %s4
  $region1: #{tpu_custom_call.1} parent=0
    #allocation2 [shape = 'u8[2048]{0}', space=vmem, size = 0x800, scoped, tag = 'input window, operand 0, single buffered']
    #allocation3 [shape = 's32[1]{0}', space=sflag, size = 0x4, scoped, tag = 'scoped memory for tpu_custom_call.1']
    #allocation4 [shape = 's32[1]{0}', space=sflag, size = 0x4, scoped, tag = 'scoped memory for tpu_custom_call.1']
    #allocation5 [shape = 'u8[32768]{0}', space=vmem, size = 0x8000, scoped, tag = 'input window, operand 1, single buffered']
    #allocation6 [shape = 's32[1]{0}', space=sflag, size = 0x4, scoped, tag = 'scoped memory for tpu_custom_call.1']
    #allocation7 [shape = 'u8[2048]{0}', space=vmem, size = 0x800, scoped, tag = 'output window, operand 0, single buffered']
    %8 = vsyncpa [#allocation3], 0
    %9 = vsyncpa [#allocation6], 0
    %10 = vsyncpa [#allocation4], 0
    // Predicated region
    $region2: #{tpu_custom_call.1} parent=1 // pred_check
      _
    $region3: #{tpu_custom_call.1} parent=1 // pred_check_branch
      %12 = sbr.rel (0) target = $region5
    $region4: #{tpu_custom_call.1} parent=1 // pred_region
      %s14 = ssub.s32 64, 64
      %15 = vsyncadd [#allocation3], %s14
      %s17 = sshll.u32 [#allocation2], 4
      %s18 = int_to_ptr.vmem [resolvable:$true] %s17
      %20 = dma.hbm_to_vmem [thread:$0]  %s0, 64, %s18, [#allocation3]
    $region5: #{tpu_custom_call.1} parent=1 // pred_fallthru
      _
    // Predicated region
    $region6: #{tpu_custom_call.1} parent=1 // pred_check
      _
    $region7: #{tpu_custom_call.1} parent=1 // pred_check_branch
      %22 = sbr.rel (0) target = $region9
    $region8: #{tpu_custom_call.1} parent=1 // pred_region
      %s24 = ssub.s32 1024, 1024
      %25 = vsyncadd [#allocation6], %s24
      %s26 = sshll.u32 [#allocation5], 4
      %s27 = int_to_ptr.vmem [resolvable:$true] %s26
      %32 = dma.hbm_to_vmem [thread:$0]  %s1, 1024, %s27, [#allocation6], 64, 64, 4
    $region9: #{tpu_custom_call.1} parent=1 // pred_fallthru
      _
    // Predicated region
    $region10: #{tpu_custom_call.1} parent=1 // pred_check
      _
    $region11: #{tpu_custom_call.1} parent=1 // pred_check_branch
      %34 = sbr.rel (0) target = $region13
    $region12: #{tpu_custom_call.1} parent=1 // pred_region
      _
    $region13: #{tpu_custom_call.1} parent=1 // pred_fallthru
      _
    // Predicated region
    $region14: #{tpu_custom_call.1} parent=1 // pred_check
      _
    $region15: #{tpu_custom_call.1} parent=1 // pred_check_branch
      %36 = sbr.rel (0) target = $region17
    $region16: #{tpu_custom_call.1} parent=1 // pred_region
      %37 = dma.done [#allocation3], 64
    $region17: #{tpu_custom_call.1} parent=1 // pred_fallthru
      _
    // Predicated region
    $region18: #{tpu_custom_call.1} parent=1 // pred_check
      _
    $region19: #{tpu_custom_call.1} parent=1 // pred_check_branch
      %39 = sbr.rel (0) target = $region21
    $region20: #{tpu_custom_call.1} parent=1 // pred_region
      %40 = dma.done [#allocation6], 1024
    $region21: #{tpu_custom_call.1} parent=1 // pred_fallthru
      _
    %v42 = vld [vmem:[#allocation2] sm:$0xf]
    %v43 = vld [vmem:[#allocation5] sm:$0xf]
    %v44 = vld [vmem:[#allocation5 + $0x4] sm:$0xf]
    %v45 = vld [vmem:[#allocation5 + $0x8] sm:$0xf]
    %v46 = vld [vmem:[#allocation5 + $0xc] sm:$0xf]
    %v47 = vld [vmem:[#allocation5 + $0x10] sm:$0xf]
    %v48 = vld [vmem:[#allocation5 + $0x14] sm:$0xf]
    %v49 = vld [vmem:[#allocation5 + $0x18] sm:$0xf]
    %v50 = vld [vmem:[#allocation5 + $0x1c] sm:$0xf]
    %v51 = vld [vmem:[#allocation5 + $0x20] sm:$0xf]
    %v52 = vld [vmem:[#allocation5 + $0x24] sm:$0xf]
    %v53 = vld [vmem:[#allocation5 + $0x28] sm:$0xf]
    %v54 = vld [vmem:[#allocation5 + $0x2c] sm:$0xf]
    %v55 = vld [vmem:[#allocation5 + $0x30] sm:$0xf]
    %v56 = vld [vmem:[#allocation5 + $0x34] sm:$0xf]
    %v57 = vld [vmem:[#allocation5 + $0x38] sm:$0xf]
    %v58 = vld [vmem:[#allocation5 + $0x3c] sm:$0xf]
    %v59 = vld [vmem:[%s2] sm:$0x1]
    %v61 = vlaneseq
    %v62 = vshrl.u32 %v61, 7
    %v63 = vsub.s32 0, %v62
    %v64 = vrot.slane %v59, %v63
    %v82 = vunpack.c.l.b16 %v43
    %v83 = vunpack.c.l.b16 %v44
    %v84 = vunpack.c.l.b16 %v45
    %v85 = vunpack.c.l.b16 %v46
    %v86 = vunpack.c.l.b16 %v47
    %v87 = vunpack.c.l.b16 %v48
    %v88 = vunpack.c.l.b16 %v49
    %v89 = vunpack.c.l.b16 %v50
    %v90 = vunpack.c.l.b16 %v51
    %v91 = vunpack.c.l.b16 %v52
    %v92 = vunpack.c.l.b16 %v53
    %v93 = vunpack.c.l.b16 %v54
    %v94 = vunpack.c.l.b16 %v55
    %v95 = vunpack.c.l.b16 %v56
    %v96 = vunpack.c.l.b16 %v57
    %v97 = vunpack.c.l.b16 %v58
    %v98 = vpack.c.b16 %v83, %v82
    %v99 = vpack.c.b16 %v85, %v84
    %v100 = vpack.c.b16 %v87, %v86
    %v101 = vpack.c.b16 %v89, %v88
    %v102 = vpack.c.b16 %v91, %v90
    %v103 = vpack.c.b16 %v93, %v92
    %v104 = vpack.c.b16 %v95, %v94
    %v105 = vpack.c.b16 %v97, %v96
    %114 = vmatprep.subr.bf16.mxu0 0
    %115 = vmatpush1.bf16.msra.mxu0 %v98
    %116 = vmatprep.subr.bf16.mxu0 0
    %117 = vmatpush1.bf16.msra.mxu0 %v99
    %118 = vmatprep.subr.bf16.mxu0 0
    %119 = vmatpush1.bf16.msra.mxu0 %v100
    %120 = vmatprep.subr.bf16.mxu0 0
    %121 = vmatpush1.bf16.msra.mxu0 %v101
    %122 = vmatprep.subr.bf16.mxu0 0
    %123 = vmatpush1.bf16.msra.mxu0 %v102
    %124 = vmatprep.subr.bf16.mxu0 0
    %125 = vmatpush1.bf16.msra.mxu0 %v103
    %126 = vmatprep.subr.bf16.mxu0 0
    %127 = vmatpush1.bf16.msra.mxu0 %v104
    %128 = vmatprep.subr.bf16.mxu0 0
    %129 = vmatpush1.bf16.msra.mxu0 %v105
    %130 = vmatprep.subr.bf16.mxu0 0
    %131 = vmatpush1.bf16.msra.mxu0 0
    %132 = vmatprep.subr.bf16.mxu0 0
    %133 = vmatpush1.bf16.msra.mxu0 0
    %134 = vmatprep.subr.bf16.mxu0 0
    %135 = vmatpush1.bf16.msra.mxu0 0
    %136 = vmatprep.subr.bf16.mxu0 0
    %137 = vmatpush1.bf16.msra.mxu0 0
    %138 = vmatprep.subr.bf16.mxu0 0
    %139 = vmatpush1.bf16.msra.mxu0 0
    %140 = vmatprep.subr.bf16.mxu0 0
    %141 = vmatpush1.bf16.msra.mxu0 0
    %142 = vmatprep.subr.bf16.mxu0 0
    %143 = vmatpush1.bf16.msra.mxu0 0
    %144 = vmatprep.subr.bf16.mxu0 0
    %145 = vmatpush1.bf16.msra.mxu0 0
    %146 = vmatprep.mubr.bf16.mxu0 0
    %147 = vmatmul.mubr.bf16.gmra.mrb[0].mxu0 %v42
    %v148 = vpop.f32.mrb[0].mxu0
    %v149 = vadd.f32 %v64, %v148
    %v150 = vpop.f32.mrb[0].mxu0
    %v151 = vpop.f32.mrb[0].mxu0
    %v152 = vpop.f32.mrb[0].mxu0
    %153 = vdwg.mxu0
    %v154 = vxor.u32 %v149, 2147483648
    %v155 = vmul.f32 %v154, 1.442695
    %v156 = vpow.pop %v155
    %v157 = vadd.f32 %v156, 1.0
    %v158 = vrcp.pop %v157
    %v159 = vmul.f32 1.0, %v158
    %v160 = vmul.f32 %v149, %v159
    %v161 = vpack.c.bf16 %v160, %v160
    %162 = vst [vmem:[#allocation7] sm:$0xf] %v161
    // Predicated region
    $region22: #{tpu_custom_call.1} parent=1 // pred_check
      _
    $region23: #{tpu_custom_call.1} parent=1 // pred_check_branch
      %164 = sbr.rel (0) target = $region25
    $region24: #{tpu_custom_call.1} parent=1 // pred_region
      %s166 = ssub.s32 64, 64
      %167 = vsyncadd [#allocation4], %s166
      %s169 = sshll.u32 [#allocation7], 4
      %s170 = int_to_ptr.vmem [resolvable:$true] %s169
      %172 = dma.vmem_to_hbm [thread:$0]  %s170, 64, %s3, [#allocation4]
    $region25: #{tpu_custom_call.1} parent=1 // pred_fallthru
      _
    // Predicated region
    $region26: #{tpu_custom_call.1} parent=1 // pred_check
      _
    $region27: #{tpu_custom_call.1} parent=1 // pred_check_branch
      %174 = sbr.rel (0) target = $region29
    $region28: #{tpu_custom_call.1} parent=1 // pred_region
      %175 = dma.done [#allocation4], 64
    $region29: #{tpu_custom_call.1} parent=1 // pred_fallthru
      _
    %176 = vsyncpa [#allocation3], 1
    %177 = vsyncpa [#allocation6], 1
    %178 = vsyncpa [#allocation4], 1

</llo_original>
